<compile_context>
chip_gen: v6e
topology: v6e:2x2x1
jax: 0.10.0
libtpu: 0.0.40
codegen_flags: <defaults>
</compile_context>

<pallas_src>
import functools
import math

import jax
import jax.numpy as jnp
from jax.experimental import pallas as pl
from jax.experimental.pallas import tpu as pltpu


def _round_up(n, m):
    return ((n + m - 1) // m) * m


def _lin_bin_labels_kernel(c_ref, x_ref, y_ref, w_ref, o_ref):
    # c_ref: (1,)      SMEM  scalar parameter c
    # x_ref: (1, LB)   VMEM  positive logits, batch on lanes
    # y_ref: (1, LB)   VMEM  labels, batch on lanes
    # w_ref: (8, OUT)  VMEM  rows = [w0+w2, w1-w2, bias, 0, 0, 0, 0, 0]
    # o_ref: (LB, OUT) VMEM  output tile, batch on sublanes (row-major)
    scale = 1.0 + jnp.abs(c_ref[0])                               # scalar (sreg)
    s = jax.nn.sigmoid(scale * x_ref[...].astype(jnp.float32))    # (1, LB) EUP
    sy = s * y_ref[...].astype(jnp.float32)                       # (1, LB) VPU

    # Stack into a full (8, LB) sublane tile and move batch lanes -> sublanes
    # with one XLU transpose (tile-aligned on both dims: 8 x multiple-of-128).
    f = jnp.concatenate(
        [s, sy, jnp.zeros((6,) + s.shape[1:], jnp.float32)], axis=0)  # (8, LB)
    ft = f.T                                                          # (LB, 8)

    # Exact-f32 rank-2 combine + bias, directly in the output's row-major
    # layout (lane-broadcast of the two columns, sublane-broadcast of the
    # weight/bias rows).
    out = (ft[:, 0:1] * w_ref[0:1, :]       # s     * (w0 + w2)
           + ft[:, 1:2] * w_ref[1:2, :]     # (s*y) * (w1 - w2)
           + w_ref[2:3, :])                 # bias
    o_ref[...] = out.astype(o_ref.dtype)


@functools.partial(jax.jit, static_argnames=("block_b", "out_dtype"))
def linear_with_binary_labels(x, labels, c, weight, bias=None, *,
                              block_b=8192, out_dtype=jnp.float32):
    """x: (B, 2) or (B,); labels: (B,); c: (1,); weight: (OUT, 3); bias: (OUT,) or None."""
    if x.ndim == 2:
        if x.shape[1] != 2:
            raise ValueError("Invalid input shape: need binary logits as input")
        x1 = x[:, 1]
    elif x.ndim == 1:
        x1 = x
    else:
        raise ValueError("Invalid input shape: need binary logits as input")

    B = x1.shape[0]
    out_features = weight.shape[0]

    # Lane tile: multiple of 128, large enough to amortize per-step overhead,
    # small enough for double-buffered VMEM, and capped so the grid has >= 2
    # steps whenever B allows (v7x 2-TC sharding of the "parallel" axis).
    lb = _round_up(min(block_b, B), 128)
    lb = min(lb, _round_up(pl.cdiv(B, 2), 128))
    lb = max(lb, 128)
    grid = (pl.cdiv(B, lb),)

    # Batch on the fast lane axis; free metadata reshapes, no padding copies.
    x_row = x1.reshape(1, B)
    y_row = labels.reshape(1, B)
    c_smem = c.reshape(1).astype(jnp.float32)

    # Fold the K=3 contraction and the bias into one small (8, OUT) operand.
    w = weight.astype(jnp.float32)
    b = (jnp.zeros((out_features,), jnp.float32) if bias is None
         else bias.astype(jnp.float32).reshape(out_features))
    w8 = jnp.zeros((8, out_features), jnp.float32)
    w8 = w8.at[0].set(w[:, 0] + w[:, 2]).at[1].set(w[:, 1] - w[:, 2]).at[2].set(b)

    return pl.pallas_call(
        _lin_bin_labels_kernel,
        out_shape=jax.ShapeDtypeStruct((B, out_features), out_dtype),
        grid_spec=pltpu.PrefetchScalarGridSpec(
            num_scalar_prefetch=0,
            grid=grid,
            in_specs=[
                pl.BlockSpec(memory_space=pltpu.MemorySpace.SMEM),    # c (1,)
                pl.BlockSpec((1, lb), lambda i: (0, i)),              # x1 row
                pl.BlockSpec((1, lb), lambda i: (0, i)),              # labels row
                pl.BlockSpec((8, out_features), lambda i: (0, 0)),    # folded W + bias
            ],
            out_specs=pl.BlockSpec((lb, out_features), lambda i: (i, 0)),
        ),
        compiler_params=pltpu.CompilerParams(
            dimension_semantics=("parallel",),
            vmem_limit_bytes=32 * 1024 * 1024,
        ),
    )(c_smem, x_row, y_row, w8)


def _reference(x, labels, c, weight, bias):
    # Pure-elementwise f32 reference (exactly the module's formula, no MXU).
    x1 = x[:, 1] if x.ndim == 2 else x
    s = jax.nn.sigmoid((1.0 + jnp.abs(c[0])) * x1.astype(jnp.float32))
    y = labels.astype(jnp.float32)
    feats = jnp.stack([s, s * y, s * (1.0 - y)], axis=-1)           # (B, 3)
    w = weight.astype(jnp.float32)
    out = (feats[:, None, :] * w[None, :, :]).sum(-1)               # (B, OUT)
    if bias is not None:
        out = out + bias.astype(jnp.float32)
    return out


if __name__ == "__main__":
    key = jax.random.PRNGKey(0)
    k_x, k_y, k_c, k_w, k_b = jax.random.split(key, 5)

    out_features = 20

    # Deterministic synthetic parameters (shapes per module __init__).
    w_bound = math.sqrt(1.0 / 3.0)
    weight = jax.random.uniform(k_w, (out_features, 3), jnp.float32,
                                minval=-w_bound, maxval=w_bound)
    b_bound = 1.0 / math.sqrt(3.0)
    bias = jax.random.uniform(k_b, (out_features,), jnp.float32,
                              minval=-b_bound, maxval=b_bound)
    c = jax.random.normal(k_c, (1,), jnp.float32)

    # Case 1: B a multiple of the 128-lane tile.
    B = 128
    x = jax.random.normal(k_x, (B, 2), jnp.float32)
    labels = jax.random.randint(k_y, (B,), 0, 2, jnp.int32)
    out = jax.block_until_ready(linear_with_binary_labels(x, labels, c, weight, bias))
    ref = _reference(x, labels, c, weight, bias)
    assert out.shape == (B, out_features), out.shape
    assert jnp.allclose(out, ref, atol=1e-5, rtol=1e-5), float(
        jnp.max(jnp.abs(out - ref)))

    # Case 2: ragged B (exercises the masked tail block; no wrapper padding).
    B2 = 100
    x2 = jax.random.normal(k_x, (B2, 2), jnp.float32)
    labels2 = jax.random.randint(k_y, (B2,), 0, 2, jnp.int32)
    out2 = jax.block_until_ready(linear_with_binary_labels(x2, labels2, c, weight, bias))
    ref2 = _reference(x2, labels2, c, weight, bias)
    assert out2.shape == (B2, out_features), out2.shape
    assert jnp.allclose(out2, ref2, atol=1e-5, rtol=1e-5), float(
        jnp.max(jnp.abs(out2 - ref2)))

    # Case 3: 1-D logits, bias=None, multi-step grid (2 "parallel" steps).
    B3 = 384
    x3 = jax.random.normal(k_x, (B3,), jnp.float32)
    labels3 = jax.random.randint(k_y, (B3,), 0, 2, jnp.int32)
    out3 = jax.block_until_ready(
        linear_with_binary_labels(x3, labels3, c, weight, None, block_b=256))
    ref3 = _reference(x3, labels3, c, weight, None)
    assert out3.shape == (B3, out_features), out3.shape
    assert jnp.allclose(out3, ref3, atol=1e-5, rtol=1e-5), float(
        jnp.max(jnp.abs(out3 - ref3)))

    print("KERNEL_OK")
</pallas_src>

<mosaic_0001>
module attributes {stable_mosaic.version = 11 : i64} {
  func.func @_lin_bin_labels_kernel(%arg0: i32, %arg1: memref<1xf32, #tpu.memory_space<smem>>, %arg2: memref<1x128xf32, #tpu.memory_space<vmem>>, %arg3: memref<1x128xi32, #tpu.memory_space<vmem>>, %arg4: memref<8x20xf32, #tpu.memory_space<vmem>>, %arg5: memref<128x20xf32, #tpu.memory_space<vmem>>) attributes {dimension_semantics = [#tpu.dimension_semantics<parallel>], iteration_bounds = array<i64: 1>, scalar_prefetch = 0 : i64, scratch_operands = 0 : i64, tpu.core_type = #tpu.core_type<tc>, window_params = [{transform_indices = @transform_0, window_bounds = array<i64: 1>}, {transform_indices = @transform_1, window_bounds = array<i64: 1, 128>}, {transform_indices = @transform_2, window_bounds = array<i64: 1, 128>}, {pipeline_mode = #tpu.pipeline_mode<synchronous>, transform_indices = @transform_3, window_bounds = array<i64: 8, 20>}, {transform_indices = @transform_4, window_bounds = array<i64: 128, 20>}]} {
    %c0 = arith.constant 0 : index
    %0 = memref.load %arg1[%c0] : memref<1xf32, #tpu.memory_space<smem>>
    %1 = math.absf %0 : f32
    %cst = arith.constant 1.000000e+00 : f32
    %2 = arith.addf %cst, %1 : f32
    %c0_0 = arith.constant 0 : index
    %c0_1 = arith.constant 0 : index
    %3 = vector.load %arg2[%c0_0, %c0_1] : memref<1x128xf32, #tpu.memory_space<vmem>>, vector<1x128xf32>
    %4 = vector.broadcast %2 : f32 to vector<1x128xf32>
    %5 = arith.mulf %4, %3 : vector<1x128xf32>
    %6 = arith.negf %5 : vector<1x128xf32>
    %7 = math.exp %6 : vector<1x128xf32>
    %cst_2 = arith.constant 1.000000e+00 : f32
    %8 = vector.broadcast %cst_2 : f32 to vector<1x128xf32>
    %9 = arith.addf %8, %7 : vector<1x128xf32>
    %10 = arith.divf %8, %9 : vector<1x128xf32>
    %c0_3 = arith.constant 0 : index
    %c0_4 = arith.constant 0 : index
    %11 = vector.load %arg3[%c0_3, %c0_4] : memref<1x128xi32, #tpu.memory_space<vmem>>, vector<1x128xi32>
    %12 = arith.sitofp %11 : vector<1x128xi32> to vector<1x128xf32>
    %13 = arith.mulf %10, %12 : vector<1x128xf32>
    %cst_5 = arith.constant 0.000000e+00 : f32
    %14 = vector.broadcast %cst_5 : f32 to vector<6x128xf32>
    %15 = tpu.concatenate %10, %13, %14 in 0 : vector<1x128xf32>, vector<1x128xf32>, vector<6x128xf32> -> vector<8x128xf32>
    %16 = tpu.transpose %15, [1, 0] : vector<8x128xf32> -> vector<128x8xf32>
    %17 = vector.extract_strided_slice %16 {offsets = [0, 0], sizes = [128, 1], strides = [1, 1]} : vector<128x8xf32> to vector<128x1xf32>
    %c0_6 = arith.constant 0 : index
    %c0_7 = arith.constant 0 : index
    %18 = vector.load %arg4[%c0_6, %c0_7] : memref<8x20xf32, #tpu.memory_space<vmem>>, vector<1x20xf32>
    %19 = vector.broadcast %17 : vector<128x1xf32> to vector<128x20xf32>
    %20 = vector.broadcast %18 : vector<1x20xf32> to vector<128x20xf32>
    %21 = arith.mulf %19, %20 : vector<128x20xf32>
    %22 = vector.extract_strided_slice %16 {offsets = [0, 1], sizes = [128, 1], strides = [1, 1]} : vector<128x8xf32> to vector<128x1xf32>
    %c1 = arith.constant 1 : index
    %c0_8 = arith.constant 0 : index
    %23 = vector.load %arg4[%c1, %c0_8] : memref<8x20xf32, #tpu.memory_space<vmem>>, vector<1x20xf32>
    %24 = vector.broadcast %22 : vector<128x1xf32> to vector<128x20xf32>
    %25 = vector.broadcast %23 : vector<1x20xf32> to vector<128x20xf32>
    %26 = arith.mulf %24, %25 : vector<128x20xf32>
    %27 = arith.addf %21, %26 : vector<128x20xf32>
    %c2 = arith.constant 2 : index
    %c0_9 = arith.constant 0 : index
    %28 = vector.load %arg4[%c2, %c0_9] : memref<8x20xf32, #tpu.memory_space<vmem>>, vector<1x20xf32>
    %29 = vector.broadcast %28 : vector<1x20xf32> to vector<128x20xf32>
    %30 = arith.addf %27, %29 : vector<128x20xf32>
    %c0_10 = arith.constant 0 : index
    %c0_11 = arith.constant 0 : index
    %31 = vector.load %arg5[%c0_10, %c0_11] : memref<128x20xf32, #tpu.memory_space<vmem>>, vector<128x20xf32>
    tpu.vector_store %arg5[%c0_10, %c0_11], %30 {strides = array<i32>} : memref<128x20xf32, #tpu.memory_space<vmem>>, vector<128x20xf32>,
    return
  }
  func.func @transform_0(%arg0: i32) -> i32 {
    %c0_i32 = arith.constant 0 : i32
    %c0_i32_0 = arith.constant 0 : i32
    return %c0_i32 : i32
  }
  func.func @transform_1(%arg0: i32) -> (i32, i32) {
    %c0_i32 = arith.constant 0 : i32
    %c0_i32_0 = arith.constant 0 : i32
    return %c0_i32, %arg0 : i32, i32
  }
  func.func @transform_2(%arg0: i32) -> (i32, i32) {
    %c0_i32 = arith.constant 0 : i32
    %c0_i32_0 = arith.constant 0 : i32
    return %c0_i32, %arg0 : i32, i32
  }
  func.func @transform_3(%arg0: i32) -> (i32, i32) {
    %c0_i32 = arith.constant 0 : i32
    %c0_i32_0 = arith.constant 0 : i32
    %c0_i32_1 = arith.constant 0 : i32
    return %c0_i32, %c0_i32_0 : i32, i32
  }
  func.func @transform_4(%arg0: i32) -> (i32, i32) {
    %c0_i32 = arith.constant 0 : i32
    %c0_i32_0 = arith.constant 0 : i32
    return %arg0, %c0_i32 : i32, i32
  }
}

</mosaic_0001>

<llo_original>
// kernel: linear_with_binary_labels.1
$region0: #{linear_with_binary_labels.1}
  #allocation0 [shape = 'u32[]', space=smem, size = 0x4, offset = 0x4, fixed_abs, tag = 'smem constant byte address 0x4 - core index']
  #allocation1 [shape = 'u32[144,128]{1,0:T(1,128)}', space=vmem, size = 0x12000, scoped, tag = 'internal scratch']
  #allocation2 [shape = 'f32[1]{0:T(128)S(6)}', space=smem, size = 0x200, scoped, tag = 'scoped memory for linear_with_binary_labels.1']
  %s0 = inlined_call_operand.<no memory space> [shape: f32[1], index: 0, kind: input, shape index: {}]
  %s1 = inlined_call_operand.vmem [shape: f32[1,128], index: 1, kind: input, shape index: {}]
  %s2 = inlined_call_operand.vmem [shape: s32[1,128], index: 2, kind: input, shape index: {}]
  %s3 = inlined_call_operand.vmem [shape: f32[8,20], index: 3, kind: input, shape index: {}]
  %s4 = inlined_call_operand.vmem [shape: f32[128,20], index: 4, kind: output, shape index: {}]
  %s5 = sld [smem:[#allocation0]]
  $region26: #{linear_with_binary_labels.1} parent=0
    _
  %s7 = ssub.s32 1, %s5
  %s8 = scalar_select 0, %s7, %s5
  %9 = sst [smem:[#allocation2]] %s0
  // Predicated region
  $region2: #{linear_with_binary_labels.1} parent=0 // pred_check
    _
  $region3: #{linear_with_binary_labels.1} parent=0 // pred_check_branch
    %11 = sbr.rel (0) target = $region5
  $region4: #{linear_with_binary_labels.1} parent=0 // pred_region
    _
  $region5: #{linear_with_binary_labels.1} parent=0 // pred_fallthru
    _
  // Predicated region
  $region6: #{linear_with_binary_labels.1} parent=0 // pred_check
    _
  $region7: #{linear_with_binary_labels.1} parent=0 // pred_check_branch
    %13 = sbr.rel (0) target = $region9
  $region8: #{linear_with_binary_labels.1} parent=0 // pred_region
    _
  $region9: #{linear_with_binary_labels.1} parent=0 // pred_fallthru
    _
  // Predicated region
  $region10: #{linear_with_binary_labels.1} parent=0 // pred_check
    _
  $region11: #{linear_with_binary_labels.1} parent=0 // pred_check_branch
    %15 = sbr.rel (0) target = $region13
  $region12: #{linear_with_binary_labels.1} parent=0 // pred_region
    _
  $region13: #{linear_with_binary_labels.1} parent=0 // pred_fallthru
    _
  // Predicated region
  $region14: #{linear_with_binary_labels.1} parent=0 // pred_check
    _
  $region15: #{linear_with_binary_labels.1} parent=0 // pred_check_branch
    %17 = sbr.rel (0) target = $region17
  $region16: #{linear_with_binary_labels.1} parent=0 // pred_region
    _
  $region17: #{linear_with_binary_labels.1} parent=0 // pred_fallthru
    _
  %s18 = sld [smem:[#allocation2]]
  %s19 = sand.u32 2147483647, %s18
  %s20 = sadd.f32 %s19, 1.0
  %v21 = vld [vmem:[%s1] sm:$0x1]
  %v22 = vstv %s20
  %v23 = vmul.f32 %v22, %v21
  %v24 = vxor.u32 %v23, 2147483648
  %v25 = vmul.f32 %v24, 1.442695
  %v26 = vpow.pop %v25
  %v27 = vadd.f32 %v26, 1.0
  %v28 = vrcp.pop %v27
  %v29 = vmul.f32 1.0, %v28
  %v30 = vld [vmem:[%s2] sm:$0x1]
  %v31 = vcvt.s32.f32 %v30
  %v32 = vmul.f32 %v29, %v31
  %v34 = vlaneseq
  %v35 = vshrl.u32 %v34, 7
  %v36 = vsub.s32 0, %v35
  %v37 = vrot.slane %v32, %v36
  %vm39 = vcmask 1040384
  %v40 = vsel %vm39, %v29, %v37
  %vm41 = vcmask 1041408
  %v42 = vsel %vm41, %v40, 0.0
  %43 = vxpose.xlu0.b32.start [1/16] %v42, 128
  %44 = vxpose.xlu0.b32.cont [2/16] 0.0, 128
  %45 = vxpose.xlu0.b32.cont [3/16] 0.0, 128
  %46 = vxpose.xlu0.b32.cont [4/16] 0.0, 128
  %47 = vxpose.xlu0.b32.cont [5/16] 0.0, 128
  %48 = vxpose.xlu0.b32.cont [6/16] 0.0, 128
  %49 = vxpose.xlu0.b32.cont [7/16] 0.0, 128
  %50 = vxpose.xlu0.b32.cont [8/16] 0.0, 128
  %51 = vxpose.xlu0.b32.cont [9/16] 0.0, 128
  %52 = vxpose.xlu0.b32.cont [10/16] 0.0, 128
  %53 = vxpose.xlu0.b32.cont [11/16] 0.0, 128
  %54 = vxpose.xlu0.b32.cont [12/16] 0.0, 128
  %55 = vxpose.xlu0.b32.cont [13/16] 0.0, 128
  %56 = vxpose.xlu0.b32.cont [14/16] 0.0, 128
  %57 = vxpose.xlu0.b32.cont [15/16] 0.0, 128
  %58 = vxpose.xlu0.b32.end [16/16] 0.0, 128
  %v59 = vpop.trf.xlu0
  %v60 = vpop.trf.xlu0
  %v61 = vpop.trf.xlu0
  %v62 = vpop.trf.xlu0
  %v63 = vpop.trf.xlu0
  %v64 = vpop.trf.xlu0
  %v65 = vpop.trf.xlu0
  %v66 = vpop.trf.xlu0
  %v67 = vpop.trf.xlu0
  %v68 = vpop.trf.xlu0
  %v69 = vpop.trf.xlu0
  %v70 = vpop.trf.xlu0
  %v71 = vpop.trf.xlu0
  %v72 = vpop.trf.xlu0
  %v73 = vpop.trf.xlu0
  %v74 = vpop.trf.xlu0
  %v75 = vld [vmem:[%s3] sm:$0x1]
  %77 = vset.pattern.permute.xlu0 0
  %78 = vperm.xlu0 %77, %v59
  %v79 = vpop.permute.xlu0 %78
  %82 = vset.pattern.permute.xlu0 0
  %83 = vperm.xlu0 %82, %v60
  %v84 = vpop.permute.xlu0 %83
  %87 = vset.pattern.permute.xlu0 0
  %88 = vperm.xlu0 %87, %v61
  %v89 = vpop.permute.xlu0 %88
  %92 = vset.pattern.permute.xlu0 0
  %93 = vperm.xlu0 %92, %v62
  %v94 = vpop.permute.xlu0 %93
  %97 = vset.pattern.permute.xlu0 0
  %98 = vperm.xlu0 %97, %v63
  %v99 = vpop.permute.xlu0 %98
  %102 = vset.pattern.permute.xlu0 0
  %103 = vperm.xlu0 %102, %v64
  %v104 = vpop.permute.xlu0 %103
  %107 = vset.pattern.permute.xlu0 0
  %108 = vperm.xlu0 %107, %v65
  %v109 = vpop.permute.xlu0 %108
  %112 = vset.pattern.permute.xlu0 0
  %113 = vperm.xlu0 %112, %v66
  %v114 = vpop.permute.xlu0 %113
  %117 = vset.pattern.permute.xlu0 0
  %118 = vperm.xlu0 %117, %v67
  %v119 = vpop.permute.xlu0 %118
  %122 = vset.pattern.permute.xlu0 0
  %123 = vperm.xlu0 %122, %v68
  %v124 = vpop.permute.xlu0 %123
  %127 = vset.pattern.permute.xlu0 0
  %128 = vperm.xlu0 %127, %v69
  %v129 = vpop.permute.xlu0 %128
  %132 = vset.pattern.permute.xlu0 0
  %133 = vperm.xlu0 %132, %v70
  %v134 = vpop.permute.xlu0 %133
  %137 = vset.pattern.permute.xlu0 0
  %138 = vperm.xlu0 %137, %v71
  %v139 = vpop.permute.xlu0 %138
  %142 = vset.pattern.permute.xlu0 0
  %143 = vperm.xlu0 %142, %v72
  %v144 = vpop.permute.xlu0 %143
  %147 = vset.pattern.permute.xlu0 0
  %148 = vperm.xlu0 %147, %v73
  %v149 = vpop.permute.xlu0 %148
  %152 = vset.pattern.permute.xlu0 0
  %153 = vperm.xlu0 %152, %v74
  %v154 = vpop.permute.xlu0 %153
  %v156 = vlaneseq
  %v157 = vshrl.u32 %v156, 7
  %v158 = vsub.s32 0, %v157
  %v159 = vrot.slane %v75, %v158
  %v160 = vmul.f32 %v79, %v159
  %v161 = vmul.f32 %v84, %v159
  %v162 = vmul.f32 %v89, %v159
  %v163 = vmul.f32 %v94, %v159
  %v164 = vmul.f32 %v99, %v159
  %v165 = vmul.f32 %v104, %v159
  %v166 = vmul.f32 %v109, %v159
  %v167 = vmul.f32 %v114, %v159
  %v168 = vmul.f32 %v119, %v159
  %v169 = vmul.f32 %v124, %v159
  %v170 = vmul.f32 %v129, %v159
  %v171 = vmul.f32 %v134, %v159
  %v172 = vmul.f32 %v139, %v159
  %v173 = vmul.f32 %v144, %v159
  %v174 = vmul.f32 %v149, %v159
  %v175 = vmul.f32 %v154, %v159
  %v176 = vld [vmem:[%s3 + $0x1] sm:$0x1]
  %177 = vset.pattern.permute.xlu0 1
  %178 = vperm.xlu0 %177, %v59
  %v179 = vpop.permute.xlu0 %178
  %181 = vset.pattern.permute.xlu0 1
  %182 = vperm.xlu0 %181, %v60
  %v183 = vpop.permute.xlu0 %182
  %185 = vset.pattern.permute.xlu0 1
  %186 = vperm.xlu0 %185, %v61
  %v187 = vpop.permute.xlu0 %186
  %189 = vset.pattern.permute.xlu0 1
  %190 = vperm.xlu0 %189, %v62
  %v191 = vpop.permute.xlu0 %190
  %193 = vset.pattern.permute.xlu0 1
  %194 = vperm.xlu0 %193, %v63
  %v195 = vpop.permute.xlu0 %194
  %197 = vset.pattern.permute.xlu0 1
  %198 = vperm.xlu0 %197, %v64
  %v199 = vpop.permute.xlu0 %198
  %201 = vset.pattern.permute.xlu0 1
  %202 = vperm.xlu0 %201, %v65
  %v203 = vpop.permute.xlu0 %202
  %205 = vset.pattern.permute.xlu0 1
  %206 = vperm.xlu0 %205, %v66
  %v207 = vpop.permute.xlu0 %206
  %209 = vset.pattern.permute.xlu0 1
  %210 = vperm.xlu0 %209, %v67
  %v211 = vpop.permute.xlu0 %210
  %213 = vset.pattern.permute.xlu0 1
  %214 = vperm.xlu0 %213, %v68
  %v215 = vpop.permute.xlu0 %214
  %217 = vset.pattern.permute.xlu0 1
  %218 = vperm.xlu0 %217, %v69
  %v219 = vpop.permute.xlu0 %218
  %221 = vset.pattern.permute.xlu0 1
  %222 = vperm.xlu0 %221, %v70
  %v223 = vpop.permute.xlu0 %222
  %225 = vset.pattern.permute.xlu0 1
  %226 = vperm.xlu0 %225, %v71
  %v227 = vpop.permute.xlu0 %226
  %229 = vset.pattern.permute.xlu0 1
  %230 = vperm.xlu0 %229, %v72
  %v231 = vpop.permute.xlu0 %230
  %233 = vset.pattern.permute.xlu0 1
  %234 = vperm.xlu0 %233, %v73
  %v235 = vpop.permute.xlu0 %234
  %237 = vset.pattern.permute.xlu0 1
  %238 = vperm.xlu0 %237, %v74
  %v239 = vpop.permute.xlu0 %238
  %v241 = vlaneseq
  %v242 = vshrl.u32 %v241, 7
  %v243 = vsub.s32 0, %v242
  %v244 = vrot.slane %v176, %v243
  %v245 = vmul.f32 %v179, %v244
  %v246 = vmul.f32 %v183, %v244
  %v247 = vmul.f32 %v187, %v244
  %v248 = vmul.f32 %v191, %v244
  %v249 = vmul.f32 %v195, %v244
  %v250 = vmul.f32 %v199, %v244
  %v251 = vmul.f32 %v203, %v244
  %v252 = vmul.f32 %v207, %v244
  %v253 = vmul.f32 %v211, %v244
  %v254 = vmul.f32 %v215, %v244
  %v255 = vmul.f32 %v219, %v244
  %v256 = vmul.f32 %v223, %v244
  %v257 = vmul.f32 %v227, %v244
  %v258 = vmul.f32 %v231, %v244
  %v259 = vmul.f32 %v235, %v244
  %v260 = vmul.f32 %v239, %v244
  %v261 = vadd.f32 %v160, %v245
  %v262 = vadd.f32 %v161, %v246
  %v263 = vadd.f32 %v162, %v247
  %v264 = vadd.f32 %v163, %v248
  %v265 = vadd.f32 %v164, %v249
  %v266 = vadd.f32 %v165, %v250
  %v267 = vadd.f32 %v166, %v251
  %v268 = vadd.f32 %v167, %v252
  %v269 = vadd.f32 %v168, %v253
  %v270 = vadd.f32 %v169, %v254
  %v271 = vadd.f32 %v170, %v255
  %v272 = vadd.f32 %v171, %v256
  %v273 = vadd.f32 %v172, %v257
  %v274 = vadd.f32 %v173, %v258
  %v275 = vadd.f32 %v174, %v259
  %v276 = vadd.f32 %v175, %v260
  %v277 = vld [vmem:[%s3 + $0x2] sm:$0x1]
  %v278 = vlaneseq
  %v279 = vshrl.u32 %v278, 7
  %v280 = vsub.s32 0, %v279
  %v281 = vrot.slane %v277, %v280
  %v282 = vadd.f32 %v261, %v281
  %v283 = vadd.f32 %v262, %v281
  %v284 = vadd.f32 %v263, %v281
  %v285 = vadd.f32 %v264, %v281
  %v286 = vadd.f32 %v265, %v281
  %v287 = vadd.f32 %v266, %v281
  %v288 = vadd.f32 %v267, %v281
  %v289 = vadd.f32 %v268, %v281
  %v290 = vadd.f32 %v269, %v281
  %v291 = vadd.f32 %v270, %v281
  %v292 = vadd.f32 %v271, %v281
  %v293 = vadd.f32 %v272, %v281
  %v294 = vadd.f32 %v273, %v281
  %v295 = vadd.f32 %v274, %v281
  %v296 = vadd.f32 %v275, %v281
  %v297 = vadd.f32 %v276, %v281
  %vm298 = vcmask 162816
  %299 = vst.msk [vmem:[%s4] sm:$0xff] %vm298, %v282
  %300 = vst.msk [vmem:[%s4 + $0x8] sm:$0xff] %vm298, %v283
  %301 = vst.msk [vmem:[%s4 + $0x10] sm:$0xff] %vm298, %v284
  %302 = vst.msk [vmem:[%s4 + $0x18] sm:$0xff] %vm298, %v285
  %303 = vst.msk [vmem:[%s4 + $0x20] sm:$0xff] %vm298, %v286
  %304 = vst.msk [vmem:[%s4 + $0x28] sm:$0xff] %vm298, %v287
  %305 = vst.msk [vmem:[%s4 + $0x30] sm:$0xff] %vm298, %v288
  %306 = vst.msk [vmem:[%s4 + $0x38] sm:$0xff] %vm298, %v289
  %307 = vst.msk [vmem:[%s4 + $0x40] sm:$0xff] %vm298, %v290
  %308 = vst.msk [vmem:[%s4 + $0x48] sm:$0xff] %vm298, %v291
  %309 = vst.msk [vmem:[%s4 + $0x50] sm:$0xff] %vm298, %v292
  %310 = vst.msk [vmem:[%s4 + $0x58] sm:$0xff] %vm298, %v293
  %311 = vst.msk [vmem:[%s4 + $0x60] sm:$0xff] %vm298, %v294
  %312 = vst.msk [vmem:[%s4 + $0x68] sm:$0xff] %vm298, %v295
  %313 = vst.msk [vmem:[%s4 + $0x70] sm:$0xff] %vm298, %v296
  %314 = vst.msk [vmem:[%s4 + $0x78] sm:$0xff] %vm298, %v297
  // Predicated region
  $region18: #{linear_with_binary_labels.1} parent=0 // pred_check
    _
  $region19: #{linear_with_binary_labels.1} parent=0 // pred_check_branch
    %316 = sbr.rel (0) target = $region21
  $region20: #{linear_with_binary_labels.1} parent=0 // pred_region
    _
  $region21: #{linear_with_binary_labels.1} parent=0 // pred_fallthru
    _
  // Predicated region
  $region22: #{linear_with_binary_labels.1} parent=0 // pred_check
    _
  $region23: #{linear_with_binary_labels.1} parent=0 // pred_check_branch
    %318 = sbr.rel (0) target = $region25
  $region24: #{linear_with_binary_labels.1} parent=0 // pred_region
    _
  $region25: #{linear_with_binary_labels.1} parent=0 // pred_fallthru
    _

</llo_original>
